<compile_context>
chip_gen: v7x
topology: tpu7x:2x2x1
jax: 0.10.0
libtpu: 0.0.40
codegen_flags: <defaults>
</compile_context>

<pallas_src>
import functools

import jax
import jax.numpy as jnp
from jax import lax
from jax.experimental import pallas as pl
from jax.experimental.pallas import tpu as pltpu


def _conv3x3_lrelu_kernel(x_ref, w_ref, b_ref, mask_ref, o_ref,
                          slab_ref, col_ref, *,
                          img_w, hw_pad, halo, lane_chunk):
    # x_ref:    (nb, Cin_pad, HWp)              channel/lane padded NCHW-flat input
    # w_ref:    (Cout, 9*Cin_pad)               weights, K ordered (tap, cin)
    # b_ref:    (Cout, 1)                       bias
    # mask_ref: (9, HWp)                        per-tap validity (1.0 / 0.0)
    # o_ref:    (nb, Cout, HWp)                 output (NCHW-flat, lane padded)
    # slab_ref: (Cin_pad, halo + nb*HWp + halo) lane-flat activation slab
    # col_ref:  (9*Cin_pad, nb*HWp)             im2col scratch
    nb, cin_pad, _ = x_ref.shape
    l = nb * hw_pad

    # 1) Stage activations once.  Input is channel-padded in the wrapper, so
    #    these are full 8-sublane, lane-aligned, unmasked copies and the padded
    #    channel rows arrive as zeros (keeps the padded K rows of col zero).
    for n in range(nb):
        slab_ref[:, halo + n * hw_pad: halo + (n + 1) * hw_pad] = (
            x_ref[n].astype(jnp.float32))

    # Keep the two halo strips zero.  The tap masking below is a select, so this
    # is belt-and-braces rather than required; it costs ~2 vreg stores per step
    # (vs. the old whole-slab zero fill every step).
    slab_ref[:, :halo] = jnp.zeros((cin_pad, halo), jnp.float32)
    slab_ref[:, halo + l:] = jnp.zeros((cin_pad, halo), jnp.float32)

    # 2) im2col: each tap is a lane-offset slice of the slab, masked by the
    #    precomputed validity row (same-padding border + lane-pad pixels).
    mask_all = mask_ref[...]                                   # (9, HWp) f32
    for dy in range(3):
        for dx in range(3):
            tap = dy * 3 + dx
            shift = (dy - 1) * img_w + (dx - 1)
            m = mask_all[tap:tap + 1, :] > 0.5                 # (1, HWp) bool
            for n in range(nb):
                base = halo + n * hw_pad + shift
                src = slab_ref[:, base: base + hw_pad]         # (Cin_pad, HWp)
                col_ref[tap * cin_pad:(tap + 1) * cin_pad,
                        n * hw_pad:(n + 1) * hw_pad] = jnp.where(m, src, 0.0)

    # 3) MXU contraction (K = 9*Cin_pad) + bias + LeakyReLU(0.2), chunked per
    #    image / per lane_chunk lanes so the live accumulator stays small and
    #    bias/activation/stores pipeline behind the next matmul chunk.
    w = w_ref[...]
    b = b_ref[...]
    for n in range(nb):
        for c0 in range(0, hw_pad, lane_chunk):
            width = min(lane_chunk, hw_pad - c0)
            cols = col_ref[:, n * hw_pad + c0: n * hw_pad + c0 + width]
            acc = jnp.dot(w, cols, preferred_element_type=jnp.float32) + b
            acc = jnp.where(acc >= 0.0, acc, 0.2 * acc)
            o_ref[n, :, c0:c0 + width] = acc.astype(o_ref.dtype)


def _vmem_budget():
    """Chip-aware (physical VMEM, scoped limit) in bytes."""
    try:
        phys = int(pltpu.get_tpu_info().vmem_capacity_bytes)
    except Exception:
        phys = 64 * 1024 * 1024          # conservative (v7x per-TC)
    limit = min((phys * 3) // 4, 100 * 1024 * 1024)
    return phys, limit


def _pick_batch_block(n, cin_pad, cout, hw_pad, halo, budget_bytes, max_nb=8):
    """Largest divisor of n (<= max_nb, <= n//2 when possible) fitting VMEM."""
    # Keep >= 2 grid steps whenever n >= 2 (v7x megacore / pipeline overlap).
    max_nb = min(max_nb, max(1, n // 2)) if n >= 2 else 1

    def footprint(nb):
        per_img = hw_pad * 4
        io = 2 * nb * (cin_pad + cout) * per_img            # double-buffered i/o
        slab = cin_pad * (nb * hw_pad + 2 * halo) * 4
        col = 9 * cin_pad * nb * hw_pad * 4
        return io + slab + col

    nb = max(1, max_nb)
    while nb > 1 and (n % nb or footprint(nb) > budget_bytes):
        nb -= 1
    return nb


def multiscale_block2_forward(x_nchw, weight_oihw, bias):
    """x_nchw: (N, Cin, H, W); weight_oihw: (Cout, Cin, 3, 3); bias: (Cout,)."""
    n, cin, img_h, img_w = x_nchw.shape
    cout = weight_oihw.shape[0]
    hw = img_h * img_w
    hw_pad = -(-hw // 128) * 128                   # lane-dense per-image extent
    cin_pad = -(-cin // 8) * 8                     # sublane-aligned K blocks
    halo = max(128, -(-(img_w + 1) // 128) * 128)  # lane-aligned halo >= W+1

    _, vmem_limit = _vmem_budget()
    nb = _pick_batch_block(n, cin_pad, cout, hw_pad, halo,
                           budget_bytes=int(vmem_limit * 0.8))
    lane_chunk = min(hw_pad, 1024)

    # Channel-pad (zeros) and lane-pad the NCHW-flat activations once in HBM so
    # every in-kernel staging write is a full (8,128)-tile copy.
    x_flat = x_nchw.reshape(n, cin, hw)
    x_flat = jnp.pad(x_flat, ((0, 0), (0, cin_pad - cin), (0, hw_pad - hw)))

    # Weights folded into the contraction axis: (Cout, 9*Cin_pad),
    # K order = (tap = dy*3+dx, cin); padded channels carry zero weights.
    w_k = jnp.transpose(weight_oihw, (0, 2, 3, 1))            # (Cout,3,3,Cin)
    w_k = jnp.pad(w_k, ((0, 0), (0, 0), (0, 0), (0, cin_pad - cin)))
    w_flat = w_k.reshape(cout, 9 * cin_pad).astype(jnp.float32)
    b2d = bias.reshape(cout, 1).astype(jnp.float32)

    # Precompute the nine per-pixel validity rows once in the wrapper (hoists
    # the iota / div / mod / compare chain out of every grid step).
    pos = jnp.arange(hw_pad, dtype=jnp.int32)
    yy, xx = pos // img_w, pos % img_w
    masks = []
    for dy in range(3):
        for dx in range(3):
            oy, ox = dy - 1, dx - 1
            v = ((pos < hw) & (yy + oy >= 0) & (yy + oy < img_h)
                 & (xx + ox >= 0) & (xx + ox < img_w))
            masks.append(v)
    mask9 = jnp.stack(masks).astype(jnp.float32)              # (9, HWp)

    kernel = functools.partial(_conv3x3_lrelu_kernel, img_w=img_w,
                               hw_pad=hw_pad, halo=halo, lane_chunk=lane_chunk)

    out_flat = pl.pallas_call(
        kernel,
        out_shape=jax.ShapeDtypeStruct((n, cout, hw_pad), x_nchw.dtype),
        grid_spec=pltpu.PrefetchScalarGridSpec(
            num_scalar_prefetch=0,
            grid=(n // nb,),
            in_specs=[
                pl.BlockSpec((nb, cin_pad, hw_pad), lambda i: (i, 0, 0)),
                pl.BlockSpec((cout, 9 * cin_pad), lambda i: (0, 0)),
                pl.BlockSpec((cout, 1), lambda i: (0, 0)),
                pl.BlockSpec((9, hw_pad), lambda i: (0, 0)),
            ],
            out_specs=pl.BlockSpec((nb, cout, hw_pad), lambda i: (i, 0, 0)),
            scratch_shapes=[
                pltpu.VMEM((cin_pad, nb * hw_pad + 2 * halo), jnp.float32),
                pltpu.VMEM((9 * cin_pad, nb * hw_pad), jnp.float32),
            ],
        ),
        compiler_params=pltpu.CompilerParams(
            dimension_semantics=("parallel",),
            vmem_limit_bytes=vmem_limit,
        ),
    )(x_flat, w_flat, b2d, mask9)

    return out_flat[:, :, :hw].reshape(n, cout, img_h, img_w)


def make_params(key, channel_in, channel_out):
    """xavier_normal_-style init scaled by 0.1 (bias = 0), PyTorch OIHW layout."""
    fan_in = channel_in * 3 * 3
    fan_out = channel_out * 3 * 3
    std = (2.0 / (fan_in + fan_out)) ** 0.5
    w = jax.random.normal(key, (channel_out, channel_in, 3, 3),
                          dtype=jnp.float32) * std * 0.1
    b = jnp.zeros((channel_out,), dtype=jnp.float32)
    return w, b


if __name__ == "__main__":
    key = jax.random.PRNGKey(0)
    k_x, k_w = jax.random.split(key)

    N, Cin, Cout, H, W = 2, 4, 8, 16, 16
    x = jax.random.normal(k_x, (N, Cin, H, W), dtype=jnp.float32)
    w, b = make_params(k_w, Cin, Cout)

    out = multiscale_block2_forward(x, w, b)
    out = jax.block_until_ready(out)

    # Pure-JAX reference (NCHW/OIHW lax conv) for a sanity check.
    ref = lax.conv_general_dilated(
        x, w, window_strides=(1, 1), padding="SAME",
        dimension_numbers=("NCHW", "OIHW", "NCHW"),
        precision=lax.Precision.HIGHEST)
    ref = ref + b[None, :, None, None]
    ref = jnp.where(ref >= 0, ref, 0.2 * ref)

    assert out.shape == (N, Cout, H, W)
    assert jnp.allclose(out, ref, atol=2e-3, rtol=2e-3)
    print("KERNEL_OK")
</pallas_src>

<mosaic_0001>
module attributes {stable_mosaic.version = 11 : i64} {
  func.func @_conv3x3_lrelu_kernel(%arg0: i32, %arg1: memref<1x8x256xf32, #tpu.memory_space<vmem>>, %arg2: memref<8x72xf32, #tpu.memory_space<vmem>>, %arg3: memref<8x1xf32, #tpu.memory_space<vmem>>, %arg4: memref<9x256xf32, #tpu.memory_space<vmem>>, %arg5: memref<1x8x256xf32, #tpu.memory_space<vmem>>, %arg6: memref<8x512xf32, #tpu.memory_space<vmem>>, %arg7: memref<72x256xf32, #tpu.memory_space<vmem>>) attributes {dimension_semantics = [#tpu.dimension_semantics<parallel>], iteration_bounds = array<i64: 2>, scalar_prefetch = 0 : i64, scratch_operands = 2 : i64, tpu.core_type = #tpu.core_type<tc>, window_params = [{transform_indices = @transform_0, window_bounds = array<i64: 1, 8, 256>}, {pipeline_mode = #tpu.pipeline_mode<synchronous>, transform_indices = @transform_1, window_bounds = array<i64: 8, 72>}, {pipeline_mode = #tpu.pipeline_mode<synchronous>, transform_indices = @transform_2, window_bounds = array<i64: 8, 1>}, {pipeline_mode = #tpu.pipeline_mode<synchronous>, transform_indices = @transform_3, window_bounds = array<i64: 9, 256>}, {transform_indices = @transform_4, window_bounds = array<i64: 1, 8, 256>}]} {
    %c0 = arith.constant 0 : index
    %c0_0 = arith.constant 0 : index
    %c0_1 = arith.constant 0 : index
    %0 = vector.load %arg1[%c0, %c0_0, %c0_1] : memref<1x8x256xf32, #tpu.memory_space<vmem>>, vector<1x8x256xf32>
    %1 = vector.shape_cast %0 : vector<1x8x256xf32> to vector<8x256xf32>
    %c0_2 = arith.constant 0 : index
    %c128 = arith.constant 128 : index
    %2 = vector.load %arg6[%c0_2, %c128] : memref<8x512xf32, #tpu.memory_space<vmem>>, vector<8x256xf32>
    tpu.vector_store %arg6[%c0_2, %c128], %1 {strides = array<i32>} : memref<8x512xf32, #tpu.memory_space<vmem>>, vector<8x256xf32>,
    %cst = arith.constant 0.000000e+00 : f32
    %3 = vector.broadcast %cst : f32 to vector<8x128xf32>
    %c0_3 = arith.constant 0 : index
    %c0_4 = arith.constant 0 : index
    %4 = vector.load %arg6[%c0_3, %c0_4] : memref<8x512xf32, #tpu.memory_space<vmem>>, vector<8x128xf32>
    tpu.vector_store %arg6[%c0_3, %c0_4], %3 {strides = array<i32>} : memref<8x512xf32, #tpu.memory_space<vmem>>, vector<8x128xf32>,
    %cst_5 = arith.constant 0.000000e+00 : f32
    %5 = vector.broadcast %cst_5 : f32 to vector<8x128xf32>
    %c0_6 = arith.constant 0 : index
    %c384 = arith.constant 384 : index
    %6 = vector.load %arg6[%c0_6, %c384] : memref<8x512xf32, #tpu.memory_space<vmem>>, vector<8x128xf32>
    tpu.vector_store %arg6[%c0_6, %c384], %5 {strides = array<i32>} : memref<8x512xf32, #tpu.memory_space<vmem>>, vector<8x128xf32>,
    %c0_7 = arith.constant 0 : index
    %c0_8 = arith.constant 0 : index
    %7 = vector.load %arg4[%c0_7, %c0_8] : memref<9x256xf32, #tpu.memory_space<vmem>>, vector<9x256xf32>
    %8 = vector.extract_strided_slice %7 {offsets = [0, 0], sizes = [1, 256], strides = [1, 1]} : vector<9x256xf32> to vector<1x256xf32>
    %cst_9 = arith.constant 5.000000e-01 : f32
    %9 = vector.broadcast %cst_9 : f32 to vector<1x256xf32>
    %10 = arith.cmpf ogt, %8, %9 : vector<1x256xf32>
    %c0_10 = arith.constant 0 : index
    %c111 = arith.constant 111 : index
    %11 = vector.load %arg6[%c0_10, %c111] : memref<8x512xf32, #tpu.memory_space<vmem>>, vector<8x256xf32>
    %cst_11 = arith.constant 0.000000e+00 : f32
    %12 = vector.shape_cast %10 : vector<1x256xi1> to vector<1x256xi1>
    %13 = vector.broadcast %12 : vector<1x256xi1> to vector<8x256xi1>
    %14 = vector.broadcast %cst_11 : f32 to vector<8x256xf32>
    %15 = arith.select %13, %11, %14 : vector<8x256xi1>, vector<8x256xf32>
    %c0_12 = arith.constant 0 : index
    %c0_13 = arith.constant 0 : index
    %16 = vector.load %arg7[%c0_12, %c0_13] : memref<72x256xf32, #tpu.memory_space<vmem>>, vector<8x256xf32>
    tpu.vector_store %arg7[%c0_12, %c0_13], %15 {strides = array<i32>} : memref<72x256xf32, #tpu.memory_space<vmem>>, vector<8x256xf32>,
    %17 = vector.extract_strided_slice %7 {offsets = [1, 0], sizes = [1, 256], strides = [1, 1]} : vector<9x256xf32> to vector<1x256xf32>
    %cst_14 = arith.constant 5.000000e-01 : f32
    %18 = vector.broadcast %cst_14 : f32 to vector<1x256xf32>
    %19 = arith.cmpf ogt, %17, %18 : vector<1x256xf32>
    %c0_15 = arith.constant 0 : index
    %c112 = arith.constant 112 : index
    %20 = vector.load %arg6[%c0_15, %c112] : memref<8x512xf32, #tpu.memory_space<vmem>>, vector<8x256xf32>
    %cst_16 = arith.constant 0.000000e+00 : f32
    %21 = vector.shape_cast %19 : vector<1x256xi1> to vector<1x256xi1>
    %22 = vector.broadcast %21 : vector<1x256xi1> to vector<8x256xi1>
    %23 = vector.broadcast %cst_16 : f32 to vector<8x256xf32>
    %24 = arith.select %22, %20, %23 : vector<8x256xi1>, vector<8x256xf32>
    %c8 = arith.constant 8 : index
    %c0_17 = arith.constant 0 : index
    %25 = vector.load %arg7[%c8, %c0_17] : memref<72x256xf32, #tpu.memory_space<vmem>>, vector<8x256xf32>
    tpu.vector_store %arg7[%c8, %c0_17], %24 {strides = array<i32>} : memref<72x256xf32, #tpu.memory_space<vmem>>, vector<8x256xf32>,
    %26 = vector.extract_strided_slice %7 {offsets = [2, 0], sizes = [1, 256], strides = [1, 1]} : vector<9x256xf32> to vector<1x256xf32>
    %cst_18 = arith.constant 5.000000e-01 : f32
    %27 = vector.broadcast %cst_18 : f32 to vector<1x256xf32>
    %28 = arith.cmpf ogt, %26, %27 : vector<1x256xf32>
    %c0_19 = arith.constant 0 : index
    %c113 = arith.constant 113 : index
    %29 = vector.load %arg6[%c0_19, %c113] : memref<8x512xf32, #tpu.memory_space<vmem>>, vector<8x256xf32>
    %cst_20 = arith.constant 0.000000e+00 : f32
    %30 = vector.shape_cast %28 : vector<1x256xi1> to vector<1x256xi1>
    %31 = vector.broadcast %30 : vector<1x256xi1> to vector<8x256xi1>
    %32 = vector.broadcast %cst_20 : f32 to vector<8x256xf32>
    %33 = arith.select %31, %29, %32 : vector<8x256xi1>, vector<8x256xf32>
    %c16 = arith.constant 16 : index
    %c0_21 = arith.constant 0 : index
    %34 = vector.load %arg7[%c16, %c0_21] : memref<72x256xf32, #tpu.memory_space<vmem>>, vector<8x256xf32>
    tpu.vector_store %arg7[%c16, %c0_21], %33 {strides = array<i32>} : memref<72x256xf32, #tpu.memory_space<vmem>>, vector<8x256xf32>,
    %35 = vector.extract_strided_slice %7 {offsets = [3, 0], sizes = [1, 256], strides = [1, 1]} : vector<9x256xf32> to vector<1x256xf32>
    %cst_22 = arith.constant 5.000000e-01 : f32
    %36 = vector.broadcast %cst_22 : f32 to vector<1x256xf32>
    %37 = arith.cmpf ogt, %35, %36 : vector<1x256xf32>
    %c0_23 = arith.constant 0 : index
    %c127 = arith.constant 127 : index
    %38 = vector.load %arg6[%c0_23, %c127] : memref<8x512xf32, #tpu.memory_space<vmem>>, vector<8x256xf32>
    %cst_24 = arith.constant 0.000000e+00 : f32
    %39 = vector.shape_cast %37 : vector<1x256xi1> to vector<1x256xi1>
    %40 = vector.broadcast %39 : vector<1x256xi1> to vector<8x256xi1>
    %41 = vector.broadcast %cst_24 : f32 to vector<8x256xf32>
    %42 = arith.select %40, %38, %41 : vector<8x256xi1>, vector<8x256xf32>
    %c24 = arith.constant 24 : index
    %c0_25 = arith.constant 0 : index
    %43 = vector.load %arg7[%c24, %c0_25] : memref<72x256xf32, #tpu.memory_space<vmem>>, vector<8x256xf32>
    tpu.vector_store %arg7[%c24, %c0_25], %42 {strides = array<i32>} : memref<72x256xf32, #tpu.memory_space<vmem>>, vector<8x256xf32>,
    %44 = vector.extract_strided_slice %7 {offsets = [4, 0], sizes = [1, 256], strides = [1, 1]} : vector<9x256xf32> to vector<1x256xf32>
    %cst_26 = arith.constant 5.000000e-01 : f32
    %45 = vector.broadcast %cst_26 : f32 to vector<1x256xf32>
    %46 = arith.cmpf ogt, %44, %45 : vector<1x256xf32>
    %c0_27 = arith.constant 0 : index
    %c128_28 = arith.constant 128 : index
    %47 = vector.load %arg6[%c0_27, %c128_28] : memref<8x512xf32, #tpu.memory_space<vmem>>, vector<8x256xf32>
    %cst_29 = arith.constant 0.000000e+00 : f32
    %48 = vector.shape_cast %46 : vector<1x256xi1> to vector<1x256xi1>
    %49 = vector.broadcast %48 : vector<1x256xi1> to vector<8x256xi1>
    %50 = vector.broadcast %cst_29 : f32 to vector<8x256xf32>
    %51 = arith.select %49, %47, %50 : vector<8x256xi1>, vector<8x256xf32>
    %c32 = arith.constant 32 : index
    %c0_30 = arith.constant 0 : index
    %52 = vector.load %arg7[%c32, %c0_30] : memref<72x256xf32, #tpu.memory_space<vmem>>, vector<8x256xf32>
    tpu.vector_store %arg7[%c32, %c0_30], %51 {strides = array<i32>} : memref<72x256xf32, #tpu.memory_space<vmem>>, vector<8x256xf32>,
    %53 = vector.extract_strided_slice %7 {offsets = [5, 0], sizes = [1, 256], strides = [1, 1]} : vector<9x256xf32> to vector<1x256xf32>
    %cst_31 = arith.constant 5.000000e-01 : f32
    %54 = vector.broadcast %cst_31 : f32 to vector<1x256xf32>
    %55 = arith.cmpf ogt, %53, %54 : vector<1x256xf32>
    %c0_32 = arith.constant 0 : index
    %c129 = arith.constant 129 : index
    %56 = vector.load %arg6[%c0_32, %c129] : memref<8x512xf32, #tpu.memory_space<vmem>>, vector<8x256xf32>
    %cst_33 = arith.constant 0.000000e+00 : f32
    %57 = vector.shape_cast %55 : vector<1x256xi1> to vector<1x256xi1>
    %58 = vector.broadcast %57 : vector<1x256xi1> to vector<8x256xi1>
    %59 = vector.broadcast %cst_33 : f32 to vector<8x256xf32>
    %60 = arith.select %58, %56, %59 : vector<8x256xi1>, vector<8x256xf32>
    %c40 = arith.constant 40 : index
    %c0_34 = arith.constant 0 : index
    %61 = vector.load %arg7[%c40, %c0_34] : memref<72x256xf32, #tpu.memory_space<vmem>>, vector<8x256xf32>
    tpu.vector_store %arg7[%c40, %c0_34], %60 {strides = array<i32>} : memref<72x256xf32, #tpu.memory_space<vmem>>, vector<8x256xf32>,
    %62 = vector.extract_strided_slice %7 {offsets = [6, 0], sizes = [1, 256], strides = [1, 1]} : vector<9x256xf32> to vector<1x256xf32>
    %cst_35 = arith.constant 5.000000e-01 : f32
    %63 = vector.broadcast %cst_35 : f32 to vector<1x256xf32>
    %64 = arith.cmpf ogt, %62, %63 : vector<1x256xf32>
    %c0_36 = arith.constant 0 : index
    %c143 = arith.constant 143 : index
    %65 = vector.load %arg6[%c0_36, %c143] : memref<8x512xf32, #tpu.memory_space<vmem>>, vector<8x256xf32>
    %cst_37 = arith.constant 0.000000e+00 : f32
    %66 = vector.shape_cast %64 : vector<1x256xi1> to vector<1x256xi1>
    %67 = vector.broadcast %66 : vector<1x256xi1> to vector<8x256xi1>
    %68 = vector.broadcast %cst_37 : f32 to vector<8x256xf32>
    %69 = arith.select %67, %65, %68 : vector<8x256xi1>, vector<8x256xf32>
    %c48 = arith.constant 48 : index
    %c0_38 = arith.constant 0 : index
    %70 = vector.load %arg7[%c48, %c0_38] : memref<72x256xf32, #tpu.memory_space<vmem>>, vector<8x256xf32>
    tpu.vector_store %arg7[%c48, %c0_38], %69 {strides = array<i32>} : memref<72x256xf32, #tpu.memory_space<vmem>>, vector<8x256xf32>,
    %71 = vector.extract_strided_slice %7 {offsets = [7, 0], sizes = [1, 256], strides = [1, 1]} : vector<9x256xf32> to vector<1x256xf32>
    %cst_39 = arith.constant 5.000000e-01 : f32
    %72 = vector.broadcast %cst_39 : f32 to vector<1x256xf32>
    %73 = arith.cmpf ogt, %71, %72 : vector<1x256xf32>
    %c0_40 = arith.constant 0 : index
    %c144 = arith.constant 144 : index
    %74 = vector.load %arg6[%c0_40, %c144] : memref<8x512xf32, #tpu.memory_space<vmem>>, vector<8x256xf32>
    %cst_41 = arith.constant 0.000000e+00 : f32
    %75 = vector.shape_cast %73 : vector<1x256xi1> to vector<1x256xi1>
    %76 = vector.broadcast %75 : vector<1x256xi1> to vector<8x256xi1>
    %77 = vector.broadcast %cst_41 : f32 to vector<8x256xf32>
    %78 = arith.select %76, %74, %77 : vector<8x256xi1>, vector<8x256xf32>
    %c56 = arith.constant 56 : index
    %c0_42 = arith.constant 0 : index
    %79 = vector.load %arg7[%c56, %c0_42] : memref<72x256xf32, #tpu.memory_space<vmem>>, vector<8x256xf32>
    tpu.vector_store %arg7[%c56, %c0_42], %78 {strides = array<i32>} : memref<72x256xf32, #tpu.memory_space<vmem>>, vector<8x256xf32>,
    %80 = vector.extract_strided_slice %7 {offsets = [8, 0], sizes = [1, 256], strides = [1, 1]} : vector<9x256xf32> to vector<1x256xf32>
    %cst_43 = arith.constant 5.000000e-01 : f32
    %81 = vector.broadcast %cst_43 : f32 to vector<1x256xf32>
    %82 = arith.cmpf ogt, %80, %81 : vector<1x256xf32>
    %c0_44 = arith.constant 0 : index
    %c145 = arith.constant 145 : index
    %83 = vector.load %arg6[%c0_44, %c145] : memref<8x512xf32, #tpu.memory_space<vmem>>, vector<8x256xf32>
    %cst_45 = arith.constant 0.000000e+00 : f32
    %84 = vector.shape_cast %82 : vector<1x256xi1> to vector<1x256xi1>
    %85 = vector.broadcast %84 : vector<1x256xi1> to vector<8x256xi1>
    %86 = vector.broadcast %cst_45 : f32 to vector<8x256xf32>
    %87 = arith.select %85, %83, %86 : vector<8x256xi1>, vector<8x256xf32>
    %c64 = arith.constant 64 : index
    %c0_46 = arith.constant 0 : index
    %88 = vector.load %arg7[%c64, %c0_46] : memref<72x256xf32, #tpu.memory_space<vmem>>, vector<8x256xf32>
    tpu.vector_store %arg7[%c64, %c0_46], %87 {strides = array<i32>} : memref<72x256xf32, #tpu.memory_space<vmem>>, vector<8x256xf32>,
    %c0_47 = arith.constant 0 : index
    %c0_48 = arith.constant 0 : index
    %89 = vector.load %arg2[%c0_47, %c0_48] : memref<8x72xf32, #tpu.memory_space<vmem>>, vector<8x72xf32>
    %c0_49 = arith.constant 0 : index
    %c0_50 = arith.constant 0 : index
    %90 = vector.load %arg3[%c0_49, %c0_50] : memref<8x1xf32, #tpu.memory_space<vmem>>, vector<8x1xf32>
    %c0_51 = arith.constant 0 : index
    %c0_52 = arith.constant 0 : index
    %91 = vector.load %arg7[%c0_51, %c0_52] : memref<72x256xf32, #tpu.memory_space<vmem>>, vector<72x256xf32>
    %cst_53 = arith.constant dense<0.000000e+00> : vector<8x256xf32>
    %92 = tpu.matmul %89, %91, %cst_53 {dimension_numbers = #tpu.dot_dimension_numbers<[1], [0], [0], [1], [0, 0, 1, 1], [], []>} : vector<8x72xf32>, vector<72x256xf32>, vector<8x256xf32> -> vector<8x256xf32>
    %93 = vector.broadcast %90 : vector<8x1xf32> to vector<8x256xf32>
    %94 = arith.addf %92, %93 : vector<8x256xf32>
    %cst_54 = arith.constant 0.000000e+00 : f32
    %95 = vector.broadcast %cst_54 : f32 to vector<8x256xf32>
    %96 = arith.cmpf oge, %94, %95 : vector<8x256xf32>
    %cst_55 = arith.constant 2.000000e-01 : f32
    %97 = vector.broadcast %cst_55 : f32 to vector<8x256xf32>
    %98 = arith.mulf %97, %94 : vector<8x256xf32>
    %99 = arith.select %96, %94, %98 : vector<8x256xi1>, vector<8x256xf32>
    %c0_56 = arith.constant 0 : index
    %c0_57 = arith.constant 0 : index
    %c0_58 = arith.constant 0 : index
    %100 = vector.load %arg5[%c0_56, %c0_57, %c0_58] : memref<1x8x256xf32, #tpu.memory_space<vmem>>, vector<1x8x256xf32>
    %101 = vector.shape_cast %100 : vector<1x8x256xf32> to vector<8x256xf32>
    %102 = vector.shape_cast %99 : vector<8x256xf32> to vector<1x8x256xf32>
    tpu.vector_store %arg5[%c0_56, %c0_57, %c0_58], %102 {strides = array<i32>} : memref<1x8x256xf32, #tpu.memory_space<vmem>>, vector<1x8x256xf32>,
    return
  }
  func.func @transform_0(%arg0: i32) -> (i32, i32, i32) {
    %c0_i32 = arith.constant 0 : i32
    %c0_i32_0 = arith.constant 0 : i32
    %c0_i32_1 = arith.constant 0 : i32
    return %arg0, %c0_i32, %c0_i32_0 : i32, i32, i32
  }
  func.func @transform_1(%arg0: i32) -> (i32, i32) {
    %c0_i32 = arith.constant 0 : i32
    %c0_i32_0 = arith.constant 0 : i32
    %c0_i32_1 = arith.constant 0 : i32
    return %c0_i32, %c0_i32_0 : i32, i32
  }
  func.func @transform_2(%arg0: i32) -> (i32, i32) {
    %c0_i32 = arith.constant 0 : i32
    %c0_i32_0 = arith.constant 0 : i32
    %c0_i32_1 = arith.constant 0 : i32
    return %c0_i32, %c0_i32_0 : i32, i32
  }
  func.func @transform_3(%arg0: i32) -> (i32, i32) {
    %c0_i32 = arith.constant 0 : i32
    %c0_i32_0 = arith.constant 0 : i32
    %c0_i32_1 = arith.constant 0 : i32
    return %c0_i32, %c0_i32_0 : i32, i32
  }
  func.func @transform_4(%arg0: i32) -> (i32, i32, i32) {
    %c0_i32 = arith.constant 0 : i32
    %c0_i32_0 = arith.constant 0 : i32
    %c0_i32_1 = arith.constant 0 : i32
    return %arg0, %c0_i32, %c0_i32_0 : i32, i32, i32
  }
}

</mosaic_0001>

<llo_original>
// kernel: tpu_custom_call.1
$region0: #{tpu_custom_call.1}
  #allocation0 [shape = 'u32[]', space=smem, size = 0x4, offset = 0x4, fixed_abs, tag = 'smem constant byte address 0x4 - core index']
  #allocation1 [shape = 'u32[144,128]{1,0:T(1,128)}', space=vmem, size = 0x12000, scoped, tag = 'internal scratch']
  #allocation2 [shape = 'f32[8,512]{1,0:T(8,128)}', space=vmem, size = 0x4000, scoped, tag = 'scratch operand']
  #allocation3 [shape = 'f32[72,256]{1,0:T(8,128)}', space=vmem, size = 0x12000, scoped, tag = 'scratch operand']
  %s0 = inlined_call_operand.hbm [shape: f32[2,8,256], index: 0, kind: input, shape index: {}]
  %s1 = inlined_call_operand.vmem [shape: f32[8,72], index: 1, kind: input, shape index: {}]
  %s2 = inlined_call_operand.vmem [shape: f32[8,1], index: 2, kind: input, shape index: {}]
  %s3 = inlined_call_operand.hbm [shape: f32[9,256], index: 3, kind: input, shape index: {}]
  %s4 = inlined_call_operand.hbm [shape: f32[2,8,256], index: 4, kind: output, shape index: {}]
  %s5 = sld [smem:[#allocation0]]
  $region57: #{tpu_custom_call.1} parent=0
    _
  %s7 = ssub.s32 1, %s5
  %s8 = scalar_select 0, %s7, %s5
  $region1: #{tpu_custom_call.1} parent=0
    #allocation4 [shape = 'u8[16384]{0}', space=vmem, size = 0x4000, scoped, tag = 'input window, operand 0']
    #allocation5 [shape = 's32[2]{0}', space=sflag, size = 0x8, scoped, tag = 'scoped memory for tpu_custom_call.1']
    #allocation6 [shape = 's32[2]{0}', space=sflag, size = 0x8, scoped, tag = 'scoped memory for tpu_custom_call.1']
    #allocation7 [shape = 'u8[16384]{0}', space=vmem, size = 0x4000, scoped, tag = 'input window, operand 3, single buffered']
    #allocation8 [shape = 's32[1]{0}', space=sflag, size = 0x4, scoped, tag = 'scoped memory for tpu_custom_call.1']
    #allocation9 [shape = 'u8[16384]{0}', space=vmem, size = 0x4000, scoped, tag = 'output window, operand 0']
    %9 = vsyncpa [#allocation5], 0
    %s10 = scalar_lea.sflag [#allocation5], 1
    %11 = vsyncpa %s10, 0
    %12 = vsyncpa [#allocation8], 0
    %13 = vsyncpa [#allocation6], 0
    %s14 = scalar_lea.sflag [#allocation6], 1
    %15 = vsyncpa %s14, 0
    loop: start=0, step=1, limit=4
    $region2: #{tpu_custom_call.1} parent=1 // loop_pre_header
      _
    $region3: #{tpu_custom_call.1} parent=1 // loop_header
      %s17 = sphi 0, %s21
      %p18 = scmp.ge.s32.totalorder %s17, 4
      %s27 = sphi 0, %s29
      %s30 = sphi 0, %s27
      %s31 = sphi 0, %s30
      %s47 = sphi 0, %s31
      %s51 = sphi 0, %s51
      %s53 = sphi 0, %s51
      %s54 = sphi 0, %s53
      %s68 = sphi 0, %s54
      %s72 = sphi 0, %s72
      %s74 = sphi 0, %s72
      %s75 = sphi 0, %s74
      %s89 = sphi 0, %s75
      %s93 = sphi 0, %s93
      %s95 = sphi 0, %s93
      %s96 = sphi 0, %s95
      %s110 = sphi 0, %s96
      %s116 = sphi 0, %s118
      %s119 = sphi 0, %s116
      %s120 = sphi 0, %s119
      %s136 = sphi 0, %s120
    $region4: #{tpu_custom_call.1} parent=1 // loop_header_branch
      %20 = sbr.rel (%p18) target = $region8
    $region5: #{tpu_custom_call.1} parent=1 // loop_body
      %s22 = ssub.s32 %s17, 1
      %s23 = ssub.s32 %s17, 2
      %s24 = sadd.s32 %s17, 1
      %s25 = ssub.s32 %s17, %s24
      %p26 = scmp.eq.s32.totalorder %s25, 0
      %s28 = sadd.s32 %s27, 1
      %s29 = scalar_select %p26, %s27, %s28
      %p32 = pneg %p26
      %p33 = scmp.eq.s32.totalorder %s17, 1
      %p34 = por %p32, %p33
      %p35 = scmp.ne.s32.totalorder %s27, %s30
      %p36 = scmp.eq.s32.totalorder %s17, 0
      %p37 = por %p35, %p36
      %p38 = scmp.ne.s32.totalorder %s27, %s30
      %p39 = scmp.eq.s32.totalorder %s22, 1
      %p40 = por %p38, %p39
      %p41 = scmp.ne.s32.totalorder %s30, %s31
      %p42 = scmp.eq.s32.totalorder %s22, 0
      %p43 = por %p41, %p42
      %p44 = scmp.ne.s32.totalorder %s30, %s31
      %p45 = scmp.eq.s32.totalorder %s23, 1
      %p46 = por %p44, %p45
      %p48 = scmp.ne.s32.totalorder %s31, %s47
      %p49 = scmp.eq.s32.totalorder %s23, 0
      %p50 = por %p48, %p49
      %s52 = sadd.s32 %s51, 1
      %p55 = scmp.eq.s32.totalorder %s17, 1
      %p56 = scmp.ne.s32.totalorder %s51, %s53
      %p57 = scmp.eq.s32.totalorder %s17, 0
      %p58 = por %p56, %p57
      %p59 = scmp.ne.s32.totalorder %s51, %s53
      %p60 = scmp.eq.s32.totalorder %s22, 1
      %p61 = por %p59, %p60
      %p62 = scmp.ne.s32.totalorder %s53, %s54
      %p63 = scmp.eq.s32.totalorder %s22, 0
      %p64 = por %p62, %p63
      %p65 = scmp.ne.s32.totalorder %s53, %s54
      %p66 = scmp.eq.s32.totalorder %s23, 1
      %p67 = por %p65, %p66
      %p69 = scmp.ne.s32.totalorder %s54, %s68
      %p70 = scmp.eq.s32.totalorder %s23, 0
      %p71 = por %p69, %p70
      %s73 = sadd.s32 %s72, 1
      %p76 = scmp.eq.s32.totalorder %s17, 1
      %p77 = scmp.ne.s32.totalorder %s72, %s74
      %p78 = scmp.eq.s32.totalorder %s17, 0
      %p79 = por %p77, %p78
      %p80 = scmp.ne.s32.totalorder %s72, %s74
      %p81 = scmp.eq.s32.totalorder %s22, 1
      %p82 = por %p80, %p81
      %p83 = scmp.ne.s32.totalorder %s74, %s75
      %p84 = scmp.eq.s32.totalorder %s22, 0
      %p85 = por %p83, %p84
      %p86 = scmp.ne.s32.totalorder %s74, %s75
      %p87 = scmp.eq.s32.totalorder %s23, 1
      %p88 = por %p86, %p87
      %p90 = scmp.ne.s32.totalorder %s75, %s89
      %p91 = scmp.eq.s32.totalorder %s23, 0
      %p92 = por %p90, %p91
      %s94 = sadd.s32 %s93, 1
      %p97 = scmp.eq.s32.totalorder %s17, 1
      %p98 = scmp.ne.s32.totalorder %s93, %s95
      %p99 = scmp.eq.s32.totalorder %s17, 0
      %p100 = por %p98, %p99
      %p101 = scmp.ne.s32.totalorder %s93, %s95
      %p102 = scmp.eq.s32.totalorder %s22, 1
      %p103 = por %p101, %p102
      %p104 = scmp.ne.s32.totalorder %s95, %s96
      %p105 = scmp.eq.s32.totalorder %s22, 0
      %p106 = por %p104, %p105
      %p107 = scmp.ne.s32.totalorder %s95, %s96
      %p108 = scmp.eq.s32.totalorder %s23, 1
      %p109 = por %p107, %p108
      %p111 = scmp.ne.s32.totalorder %s96, %s110
      %p112 = scmp.eq.s32.totalorder %s23, 0
      %p113 = por %p111, %p112
      %s114 = ssub.s32 %s17, %s24
      %p115 = scmp.eq.s32.totalorder %s114, 0
      %s117 = sadd.s32 %s116, 1
      %s118 = scalar_select %p115, %s116, %s117
      %p121 = pneg %p115
      %p122 = scmp.eq.s32.totalorder %s17, 1
      %p123 = por %p121, %p122
      %p124 = scmp.ne.s32.totalorder %s116, %s119
      %p125 = scmp.eq.s32.totalorder %s17, 0
      %p126 = por %p124, %p125
      %p127 = scmp.ne.s32.totalorder %s116, %s119
      %p128 = scmp.eq.s32.totalorder %s22, 1
      %p129 = por %p127, %p128
      %p130 = scmp.ne.s32.totalorder %s119, %s120
      %p131 = scmp.eq.s32.totalorder %s22, 0
      %p132 = por %p130, %p131
      %p133 = scmp.ne.s32.totalorder %s119, %s120
      %p134 = scmp.eq.s32.totalorder %s23, 1
      %p135 = por %p133, %p134
      %p137 = scmp.ne.s32.totalorder %s120, %s136
      %p138 = scmp.eq.s32.totalorder %s23, 0
      %p139 = por %p137, %p138
      %p140 = scmp.le.s32.totalorder 1, %s17
      %p141 = scmp.lt.s32.totalorder %s17, 3
      %p142 = pnand %p140, %p141
      %p143 = pneg %p142
      // Predicated region
      $region9: #{tpu_custom_call.1} parent=5 // pred_check
        _
      $region10: #{tpu_custom_call.1} parent=5 // pred_check_branch
        %145 = sbr.rel (%p142) target = $region12
      $region11: #{tpu_custom_call.1} parent=5 // pred_region
        %s146 = ssub.s32 %s17, 1
        // Predicated region
        $region13: #{tpu_custom_call.1} parent=11 // pred_check
          %p147 = pneg %p64
        $region14: #{tpu_custom_call.1} parent=11 // pred_check_branch
          %149 = sbr.rel (%p147) target = $region16
        $region15: #{tpu_custom_call.1} parent=11 // pred_region
          _
        $region16: #{tpu_custom_call.1} parent=11 // pred_fallthru
          _
        // Predicated region
        $region17: #{tpu_custom_call.1} parent=11 // pred_check
          %p150 = pneg %p85
        $region18: #{tpu_custom_call.1} parent=11 // pred_check_branch
          %152 = sbr.rel (%p150) target = $region20
        $region19: #{tpu_custom_call.1} parent=11 // pred_region
          _
        $region20: #{tpu_custom_call.1} parent=11 // pred_fallthru
          _
        // Predicated region
        $region21: #{tpu_custom_call.1} parent=11 // pred_check
          %p153 = pneg %p106
        $region22: #{tpu_custom_call.1} parent=11 // pred_check_branch
          %155 = sbr.rel (%p153) target = $region24
        $region23: #{tpu_custom_call.1} parent=11 // pred_region
          %s157 = ssub.s32 512, 512
          %158 = vsyncadd [#allocation8], %s157
          %s159 = sshll.u32 [#allocation7], 4
          %s160 = int_to_ptr.vmem [resolvable:$true] %s159
          %165 = dma.hbm_to_vmem [thread:$0]  %s3, 512, %s160, [#allocation8], 256, 256, 16
        $region24: #{tpu_custom_call.1} parent=11 // pred_fallthru
          _
      $region12: #{tpu_custom_call.1} parent=5 // pred_fallthru
        _
      %p166 = scmp.lt.s32.totalorder %s17, 2
      // Predicated region
      $region25: #{tpu_custom_call.1} parent=5 // pred_check
        %p167 = pneg %p166
      $region26: #{tpu_custom_call.1} parent=5 // pred_check_branch
        %169 = sbr.rel (%p167) target = $region28
      $region27: #{tpu_custom_call.1} parent=5 // pred_region
        // Predicated region
        $region29: #{tpu_custom_call.1} parent=27 // pred_check
          %p170 = pneg %p37
        $region30: #{tpu_custom_call.1} parent=27 // pred_check_branch
          %172 = sbr.rel (%p170) target = $region32
        $region31: #{tpu_custom_call.1} parent=27 // pred_region
          %s173 = sand.u32 %s27, 1
          %s174 = scalar_lea.sflag [#allocation5], %s173
          %s175 = sand.u32 %s27, 1
          %s176 = smul.addr %s175, 16
          %s177 = scalar_lea.vmem [#allocation4], %s176
          %s179 = ssub.s32 256, 256
          %180 = vsyncadd %s174, %s179
          %s181 = smul.addr %s17, 2
          %s182 = smul.addr %s181, 128
          %s183 = scalar_lea.hbm %s0, %s182
          %s185 = sshll.u32 %s177, 4
          %s186 = int_to_ptr.vmem [resolvable:$true] %s185
          %188 = dma.hbm_to_vmem [thread:$0]  %s183, 256, %s186, %s174
        $region32: #{tpu_custom_call.1} parent=27 // pred_fallthru
          _
      $region28: #{tpu_custom_call.1} parent=5 // pred_fallthru
        _
      %p189 = scmp.le.s32.totalorder 1, %s17
      %p190 = scmp.lt.s32.totalorder %s17, 3
      %p191 = pnand %p189, %p190
      %p192 = pneg %p191
      // Predicated region
      $region33: #{tpu_custom_call.1} parent=5 // pred_check
        _
      $region34: #{tpu_custom_call.1} parent=5 // pred_check_branch
        %194 = sbr.rel (%p191) target = $region36
      $region35: #{tpu_custom_call.1} parent=5 // pred_region
        %s195 = ssub.s32 %s17, 1
        %s196 = sand.u32 %s30, 1
        %s197 = scalar_lea.sflag [#allocation5], %s196
        %s198 = sand.u32 %s30, 1
        %s199 = smul.addr %s198, 16
        %s200 = scalar_lea.vmem [#allocation4], %s199
        // Predicated region
        $region37: #{tpu_custom_call.1} parent=35 // pred_check
          %p201 = pneg %p43
        $region38: #{tpu_custom_call.1} parent=35 // pred_check_branch
          %203 = sbr.rel (%p201) target = $region40
        $region39: #{tpu_custom_call.1} parent=35 // pred_region
          %204 = dma.done %s197, 256
        $region40: #{tpu_custom_call.1} parent=35 // pred_fallthru
          _
        // Predicated region
        $region41: #{tpu_custom_call.1} parent=35 // pred_check
          %p205 = pneg %p106
        $region42: #{tpu_custom_call.1} parent=35 // pred_check_branch
          %207 = sbr.rel (%p205) target = $region44
        $region43: #{tpu_custom_call.1} parent=35 // pred_region
          %208 = dma.done [#allocation8], 512
        $region44: #{tpu_custom_call.1} parent=35 // pred_fallthru
          _
        %s209 = sand.u32 %s30, 1
        %s210 = scalar_lea.sflag [#allocation5], %s209
        %s211 = sand.u32 %s30, 1
        %s212 = smul.addr %s211, 16
        %s213 = scalar_lea.vmem [#allocation4], %s212
        %p214 = pneg %p43
        %p215 = pneg %p40
        %p216 = pneg %p64
        %p217 = pneg %p61
        %p218 = pneg %p85
        %p219 = pneg %p82
        %p220 = pneg %p106
        %p221 = pneg %p103
        %p222 = pneg %p132
        %p223 = pneg %p129
        %s224 = sand.u32 %s119, 1
        %s225 = scalar_lea.sflag [#allocation6], %s224
        %s226 = sand.u32 %s119, 1
        %s227 = smul.addr %s226, 16
        %s228 = scalar_lea.vmem [#allocation9], %s227
        %v229 = vld [vmem:[%s200] sm:$0xff]
        %v230 = vld [vmem:[%s200 + $0x8] sm:$0xff]
        %231 = vst [vmem:[#allocation2 + $0x8] sm:$0xff] %v229
        %232 = vst [vmem:[#allocation2 + $0x10] sm:$0xff] %v230
        %233 = vst [vmem:[#allocation2] sm:$0xff] 0.0
        %234 = vst [vmem:[#allocation2 + $0x18] sm:$0xff] 0.0
        %v235 = vld [vmem:[#allocation7] sm:$0xff]
        %v236 = vld [vmem:[#allocation7 + $0x8] sm:$0xff]
        %v237 = vld [vmem:[#allocation7 + $0x10] sm:$0x1]
        %v238 = vld [vmem:[#allocation7 + $0x18] sm:$0x1]
        %vm239 = vcmp.gt.f32.partialorder %v235, 0.5
        %vm240 = vcmp.gt.f32.partialorder %v236, 0.5
        %v241 = vld [vmem:[#allocation2] sm:$0xff]
        %v242 = vld [vmem:[#allocation2 + $0x8] sm:$0xff]
        %v243 = vld [vmem:[#allocation2 + $0x10] sm:$0xff]
        %v244 = vsel %vm239, 1, 0
        %v245 = vsel %vm240, 1, 0
        %v246 = vlaneseq
        %v247 = vshrl.u32 %v246, 7
        %v248 = vsub.s32 0, %v247
        %v249 = vrot.slane %v244, %v248
        %v250 = vlaneseq
        %v251 = vshrl.u32 %v250, 7
        %v252 = vsub.s32 0, %v251
        %v253 = vrot.slane %v245, %v252
        %vm254 = vcmp.eq.s32.totalorder %v249, 1
        %vm255 = vcmp.eq.s32.totalorder %v253, 1
        %259 = vrot.lane.b32.xlu0 %v241, 17
        %v260 = vpop.permute.xlu0 %259
        %261 = vrot.lane.b32.xlu0 %v242, 17
        %v262 = vpop.permute.xlu0 %261
        %263 = vrot.lane.b32.xlu0 %v243, 17
        %v264 = vpop.permute.xlu0 %263
        %vm265 = vcmask 138240
        %v266 = vsel %vm265, %v260, %v262
        %v267 = vsel %vm265, %v262, %v264
        %v270 = vsel %vm254, %v266, 0.0
        %v271 = vsel %vm255, %v267, 0.0
        %272 = vst [vmem:[#allocation3] sm:$0xff] %v270
        %273 = vst [vmem:[#allocation3 + $0x8] sm:$0xff] %v271
        %v274 = vld [vmem:[#allocation2] sm:$0xff]
        %v275 = vld [vmem:[#allocation2 + $0x8] sm:$0xff]
        %v276 = vld [vmem:[#allocation2 + $0x10] sm:$0xff]
        %v277 = vlaneseq
        %v278 = vshrl.u32 %v277, 7
        %v279 = vsub.s32 1, %v278
        %v280 = vrot.slane %v244, %v279
        %v281 = vlaneseq
        %v282 = vshrl.u32 %v281, 7
        %v283 = vsub.s32 1, %v282
        %v284 = vrot.slane %v245, %v283
        %vm285 = vcmp.eq.s32.totalorder %v280, 1
        %vm286 = vcmp.eq.s32.totalorder %v284, 1
        %290 = vrot.lane.b32.xlu0 %v274, 16
        %v291 = vpop.permute.xlu0 %290
        %292 = vrot.lane.b32.xlu0 %v275, 16
        %v293 = vpop.permute.xlu0 %292
        %294 = vrot.lane.b32.xlu0 %v276, 16
        %v295 = vpop.permute.xlu0 %294
        %vm296 = vcmask 130048
        %v297 = vsel %vm296, %v291, %v293
        %v298 = vsel %vm296, %v293, %v295
        %v301 = vsel %vm285, %v297, 0.0
        %v302 = vsel %vm286, %v298, 0.0
        %303 = vst [vmem:[#allocation3 + $0x10] sm:$0xff] %v301
        %304 = vst [vmem:[#allocation3 + $0x18] sm:$0xff] %v302
        %v305 = vld [vmem:[#allocation2] sm:$0xff]
        %v306 = vld [vmem:[#allocation2 + $0x8] sm:$0xff]
        %v307 = vld [vmem:[#allocation2 + $0x10] sm:$0xff]
        %v308 = vlaneseq
        %v309 = vshrl.u32 %v308, 7
        %v310 = vsub.s32 2, %v309
        %v311 = vrot.slane %v244, %v310
        %v312 = vlaneseq
        %v313 = vshrl.u32 %v312, 7
        %v314 = vsub.s32 2, %v313
        %v315 = vrot.slane %v245, %v314
        %vm316 = vcmp.eq.s32.totalorder %v311, 1
        %vm317 = vcmp.eq.s32.totalorder %v315, 1
        %321 = vrot.lane.b32.xlu0 %v305, 15
        %v322 = vpop.permute.xlu0 %321
        %323 = vrot.lane.b32.xlu0 %v306, 15
        %v324 = vpop.permute.xlu0 %323
        %325 = vrot.lane.b32.xlu0 %v307, 15
        %v326 = vpop.permute.xlu0 %325
        %vm327 = vcmask 121856
        %v328 = vsel %vm327, %v322, %v324
        %v329 = vsel %vm327, %v324, %v326
        %v332 = vsel %vm316, %v328, 0.0
        %v333 = vsel %vm317, %v329, 0.0
        %334 = vst [vmem:[#allocation3 + $0x20] sm:$0xff] %v332
        %335 = vst [vmem:[#allocation3 + $0x28] sm:$0xff] %v333
        %v336 = vld [vmem:[#allocation2] sm:$0xff]
        %v337 = vld [vmem:[#allocation2 + $0x8] sm:$0xff]
        %v338 = vld [vmem:[#allocation2 + $0x10] sm:$0xff]
        %v339 = vlaneseq
        %v340 = vshrl.u32 %v339, 7
        %v341 = vsub.s32 3, %v340
        %v342 = vrot.slane %v244, %v341
        %v343 = vlaneseq
        %v344 = vshrl.u32 %v343, 7
        %v345 = vsub.s32 3, %v344
        %v346 = vrot.slane %v245, %v345
        %vm347 = vcmp.eq.s32.totalorder %v342, 1
        %vm348 = vcmp.eq.s32.totalorder %v346, 1
        %352 = vrot.lane.b32.xlu0 %v336, 1
        %v353 = vpop.permute.xlu0 %352
        %354 = vrot.lane.b32.xlu0 %v337, 1
        %v355 = vpop.permute.xlu0 %354
        %356 = vrot.lane.b32.xlu0 %v338, 1
        %v357 = vpop.permute.xlu0 %356
        %vm358 = vcmask 7168
        %v359 = vsel %vm358, %v353, %v355
        %v360 = vsel %vm358, %v355, %v357
        %v363 = vsel %vm347, %v359, 0.0
        %v364 = vsel %vm348, %v360, 0.0
        %365 = vst [vmem:[#allocation3 + $0x30] sm:$0xff] %v363
        %366 = vst [vmem:[#allocation3 + $0x38] sm:$0xff] %v364
        %v367 = vld [vmem:[#allocation2 + $0x8] sm:$0xff]
        %v368 = vld [vmem:[#allocation2 + $0x10] sm:$0xff]
        %v369 = vlaneseq
        %v370 = vshrl.u32 %v369, 7
        %v371 = vsub.s32 4, %v370
        %v372 = vrot.slane %v244, %v371
        %v373 = vlaneseq
        %v374 = vshrl.u32 %v373, 7
        %v375 = vsub.s32 4, %v374
        %v376 = vrot.slane %v245, %v375
        %vm377 = vcmp.eq.s32.totalorder %v372, 1
        %vm378 = vcmp.eq.s32.totalorder %v376, 1
        %v379 = vsel %vm377, %v367, 0.0
        %v380 = vsel %vm378, %v368, 0.0
        %381 = vst [vmem:[#allocation3 + $0x40] sm:$0xff] %v379
        %382 = vst [vmem:[#allocation3 + $0x48] sm:$0xff] %v380
        %v383 = vld [vmem:[#allocation2 + $0x8] sm:$0xff]
        %v384 = vld [vmem:[#allocation2 + $0x10] sm:$0xff]
        %v385 = vld [vmem:[#allocation2 + $0x18] sm:$0xff]
        %v386 = vlaneseq
        %v387 = vshrl.u32 %v386, 7
        %v388 = vsub.s32 5, %v387
        %v389 = vrot.slane %v244, %v388
        %v390 = vlaneseq
        %v391 = vshrl.u32 %v390, 7
        %v392 = vsub.s32 5, %v391
        %v393 = vrot.slane %v245, %v392
        %vm394 = vcmp.eq.s32.totalorder %v389, 1
        %vm395 = vcmp.eq.s32.totalorder %v393, 1
        %399 = vrot.lane.b32.xlu0 %v383, 127
        %v400 = vpop.permute.xlu0 %399
        %401 = vrot.lane.b32.xlu0 %v384, 127
        %v402 = vpop.permute.xlu0 %401
        %403 = vrot.lane.b32.xlu0 %v385, 127
        %v404 = vpop.permute.xlu0 %403
        %vm405 = vcmask 1039360
        %v406 = vsel %vm405, %v400, %v402
        %v407 = vsel %vm405, %v402, %v404
        %v410 = vsel %vm394, %v406, 0.0
        %v411 = vsel %vm395, %v407, 0.0
        %412 = vst [vmem:[#allocation3 + $0x50] sm:$0xff] %v410
        %413 = vst [vmem:[#allocation3 + $0x58] sm:$0xff] %v411
        %v414 = vld [vmem:[#allocation2 + $0x8] sm:$0xff]
        %v415 = vld [vmem:[#allocation2 + $0x10] sm:$0xff]
        %v416 = vld [vmem:[#allocation2 + $0x18] sm:$0xff]
        %v417 = vlaneseq
        %v418 = vshrl.u32 %v417, 7
        %v419 = vsub.s32 6, %v418
        %v420 = vrot.slane %v244, %v419
        %v421 = vlaneseq
        %v422 = vshrl.u32 %v421, 7
        %v423 = vsub.s32 6, %v422
        %v424 = vrot.slane %v245, %v423
        %vm425 = vcmp.eq.s32.totalorder %v420, 1
        %vm426 = vcmp.eq.s32.totalorder %v424, 1
        %430 = vrot.lane.b32.xlu0 %v414, 113
        %v431 = vpop.permute.xlu0 %430
        %432 = vrot.lane.b32.xlu0 %v415, 113
        %v433 = vpop.permute.xlu0 %432
        %434 = vrot.lane.b32.xlu0 %v416, 113
        %v435 = vpop.permute.xlu0 %434
        %vm436 = vcmask 924672
        %v437 = vsel %vm436, %v431, %v433
        %v438 = vsel %vm436, %v433, %v435
        %v441 = vsel %vm425, %v437, 0.0
        %v442 = vsel %vm426, %v438, 0.0
        %443 = vst [vmem:[#allocation3 + $0x60] sm:$0xff] %v441
        %444 = vst [vmem:[#allocation3 + $0x68] sm:$0xff] %v442
        %v445 = vld [vmem:[#allocation2 + $0x8] sm:$0xff]
        %v446 = vld [vmem:[#allocation2 + $0x10] sm:$0xff]
        %v447 = vld [vmem:[#allocation2 + $0x18] sm:$0xff]
        %v448 = vlaneseq
        %v449 = vshrl.u32 %v448, 7
        %v450 = vsub.s32 7, %v449
        %v451 = vrot.slane %v244, %v450
        %v452 = vlaneseq
        %v453 = vshrl.u32 %v452, 7
        %v454 = vsub.s32 7, %v453
        %v455 = vrot.slane %v245, %v454
        %vm456 = vcmp.eq.s32.totalorder %v451, 1
        %vm457 = vcmp.eq.s32.totalorder %v455, 1
        %461 = vrot.lane.b32.xlu0 %v445, 112
        %v462 = vpop.permute.xlu0 %461
        %463 = vrot.lane.b32.xlu0 %v446, 112
        %v464 = vpop.permute.xlu0 %463
        %465 = vrot.lane.b32.xlu0 %v447, 112
        %v466 = vpop.permute.xlu0 %465
        %vm467 = vcmask 916480
        %v468 = vsel %vm467, %v462, %v464
        %v469 = vsel %vm467, %v464, %v466
        %v472 = vsel %vm456, %v468, 0.0
        %v473 = vsel %vm457, %v469, 0.0
        %474 = vst [vmem:[#allocation3 + $0x70] sm:$0xff] %v472
        %475 = vst [vmem:[#allocation3 + $0x78] sm:$0xff] %v473
        %vm476 = vcmp.gt.f32.partialorder %v237, 0.5
        %vm477 = vcmp.gt.f32.partialorder %v238, 0.5
        %v478 = vld [vmem:[#allocation2 + $0x8] sm:$0xff]
        %v479 = vld [vmem:[#allocation2 + $0x10] sm:$0xff]
        %v480 = vld [vmem:[#allocation2 + $0x18] sm:$0xff]
        %v481 = vsel %vm476, 1, 0
        %v482 = vsel %vm477, 1, 0
        %v483 = vlaneseq
        %v484 = vshrl.u32 %v483, 7
        %v485 = vsub.s32 0, %v484
        %v486 = vrot.slane %v481, %v485
        %v487 = vlaneseq
        %v488 = vshrl.u32 %v487, 7
        %v489 = vsub.s32 0, %v488
        %v490 = vrot.slane %v482, %v489
        %vm491 = vcmp.eq.s32.totalorder %v486, 1
        %vm492 = vcmp.eq.s32.totalorder %v490, 1
        %496 = vrot.lane.b32.xlu0 %v478, 111
        %v497 = vpop.permute.xlu0 %496
        %498 = vrot.lane.b32.xlu0 %v479, 111
        %v499 = vpop.permute.xlu0 %498
        %500 = vrot.lane.b32.xlu0 %v480, 111
        %v501 = vpop.permute.xlu0 %500
        %vm502 = vcmask 908288
        %v503 = vsel %vm502, %v497, %v499
        %v504 = vsel %vm502, %v499, %v501
        %v507 = vsel %vm491, %v503, 0.0
        %v508 = vsel %vm492, %v504, 0.0
        %509 = vst [vmem:[#allocation3 + $0x80] sm:$0xff] %v507
        %510 = vst [vmem:[#allocation3 + $0x88] sm:$0xff] %v508
        %v511 = vld [vmem:[%s1] sm:$0xff]
        %v512 = vld [vmem:[%s2] sm:$0xff]
        %v513 = vld [vmem:[#allocation3] sm:$0xff]
        %v514 = vld [vmem:[#allocation3 + $0x8] sm:$0xff]
        %v515 = vld [vmem:[#allocation3 + $0x10] sm:$0xff]
        %v516 = vld [vmem:[#allocation3 + $0x18] sm:$0xff]
        %v517 = vld [vmem:[#allocation3 + $0x20] sm:$0xff]
        %v518 = vld [vmem:[#allocation3 + $0x28] sm:$0xff]
        %v519 = vld [vmem:[#allocation3 + $0x30] sm:$0xff]
        %v520 = vld [vmem:[#allocation3 + $0x38] sm:$0xff]
        %v521 = vld [vmem:[#allocation3 + $0x40] sm:$0xff]
        %v522 = vld [vmem:[#allocation3 + $0x48] sm:$0xff]
        %v523 = vld [vmem:[#allocation3 + $0x50] sm:$0xff]
        %v524 = vld [vmem:[#allocation3 + $0x58] sm:$0xff]
        %v525 = vld [vmem:[#allocation3 + $0x60] sm:$0xff]
        %v526 = vld [vmem:[#allocation3 + $0x68] sm:$0xff]
        %v527 = vld [vmem:[#allocation3 + $0x70] sm:$0xff]
        %v528 = vld [vmem:[#allocation3 + $0x78] sm:$0xff]
        %v529 = vld [vmem:[#allocation3 + $0x80] sm:$0xff]
        %v530 = vld [vmem:[#allocation3 + $0x88] sm:$0xff]
        %532 = vset.pattern.permute.xlu0 0
        %533 = vperm.xlu0 %532, %v512
        %v534 = vpop.permute.xlu0 %533
        %vm536 = vcmask 588800
        %v538 = vsel %vm536, %v511, 0
        %540 = vmatprep.subr.mxu0 %v514
        %541 = vmatpush1.msra.mxu0 %v513
        %542 = vmatprep.subr.mxu0 %v516
        %543 = vmatpush1.msra.mxu0 %v515
        %544 = vmatprep.subr.mxu0 %v518
        %545 = vmatpush1.msra.mxu0 %v517
        %546 = vmatprep.subr.mxu0 %v520
        %547 = vmatpush1.msra.mxu0 %v519
        %548 = vmatprep.subr.mxu0 %v522
        %549 = vmatpush1.msra.mxu0 %v521
        %550 = vmatprep.subr.mxu0 %v524
        %551 = vmatpush1.msra.mxu0 %v523
        %552 = vmatprep.subr.mxu0 %v526
        %553 = vmatpush1.msra.mxu0 %v525
        %554 = vmatprep.subr.mxu0 %v528
        %555 = vmatpush1.msra.mxu0 %v527
        %556 = vmatprep.subr.mxu0 %v530
        %557 = vmatpush1.msra.mxu0 %v529
        %558 = vmatprep.subr.mxu0 0.0
        %559 = vmatpush1.msra.mxu0 0.0
        %560 = vmatprep.subr.mxu0 0.0
        %561 = vmatpush1.msra.mxu0 0.0
        %562 = vmatprep.subr.mxu0 0.0
        %563 = vmatpush1.msra.mxu0 0.0
        %564 = vmatprep.subr.mxu0 0.0
        %565 = vmatpush1.msra.mxu0 0.0
        %566 = vmatprep.subr.mxu0 0.0
        %567 = vmatpush1.msra.mxu0 0.0
        %568 = vmatprep.subr.mxu0 0.0
        %569 = vmatpush1.msra.mxu0 0.0
        %570 = vmatprep.subr.mxu0 0.0
        %571 = vmatpush1.msra.mxu0 0.0
        %572 = vmatprep.subr.mxu0 0.0
        %573 = vmatpush1.msra.mxu0 0.0
        %574 = vmatprep.subr.mxu0 0.0
        %575 = vmatpush1.msra.mxu0 0.0
        %576 = vmatprep.subr.mxu0 0.0
        %577 = vmatpush1.msra.mxu0 0.0
        %578 = vmatprep.subr.mxu0 0.0
        %579 = vmatpush1.msra.mxu0 0.0
        %580 = vmatprep.subr.mxu0 0.0
        %581 = vmatpush1.msra.mxu0 0.0
        %582 = vmatprep.subr.mxu0 0.0
        %583 = vmatpush1.msra.mxu0 0.0
        %584 = vmatprep.subr.mxu0 0.0
        %585 = vmatpush1.msra.mxu0 0.0
        %586 = vmatprep.subr.mxu0 0.0
        %587 = vmatpush1.msra.mxu0 0.0
        %588 = vmatprep.subr.mxu0 0.0
        %589 = vmatpush1.msra.mxu0 0.0
        %590 = vmatprep.subr.mxu0 0.0
        %591 = vmatpush1.msra.mxu0 0.0
        %592 = vmatprep.subr.mxu0 0.0
        %593 = vmatpush1.msra.mxu0 0.0
        %594 = vmatprep.subr.mxu0 0.0
        %595 = vmatpush1.msra.mxu0 0.0
        %596 = vmatprep.subr.mxu0 0.0
        %597 = vmatpush1.msra.mxu0 0.0
        %598 = vmatprep.subr.mxu0 0.0
        %599 = vmatpush1.msra.mxu0 0.0
        %600 = vmatprep.subr.mxu0 0.0
        %601 = vmatpush1.msra.mxu0 0.0
        %602 = vmatprep.subr.mxu0 0.0
        %603 = vmatpush1.msra.mxu0 0.0
        %604 = vmatprep.mubr.f32.mxu0 0.0
        %605 = vmatmul.mubr.f32.gmra.mrb[0].mxu0 %v538
        %v606 = vpop.f32.mrb[0].mxu0
        %v607 = vadd.f32 %v534, %v606
        %v608 = vpop.f32.mrb[0].mxu0
        %v609 = vadd.f32 %v534, %v608
        %610 = vdwg.mxu0
        %vm611 = vcmp.ge.f32.partialorder %v607, 0.0
        %vm612 = vcmp.ge.f32.partialorder %v609, 0.0
        %v613 = vmul.f32 %v607, 0.2
        %v614 = vmul.f32 %v609, 0.2
        %v615 = vsel %vm611, %v607, %v613
        %v616 = vsel %vm612, %v609, %v614
        %617 = vst [vmem:[%s228] sm:$0xff] %v615
        %618 = vst [vmem:[%s228 + $0x8] sm:$0xff] %v616
        %s619 = sand.u32 %s119, 1
        %s620 = scalar_lea.sflag [#allocation6], %s619
        %s621 = sand.u32 %s119, 1
        %s622 = smul.addr %s621, 16
        %s623 = scalar_lea.vmem [#allocation9], %s622
        // Predicated region
        $region45: #{tpu_custom_call.1} parent=35 // pred_check
          %p624 = pneg %p129
        $region46: #{tpu_custom_call.1} parent=35 // pred_check_branch
          %626 = sbr.rel (%p624) target = $region48
        $region47: #{tpu_custom_call.1} parent=35 // pred_region
          %s628 = ssub.s32 256, 256
          %629 = vsyncadd %s620, %s628
          %s630 = smul.addr %s22, 2
          %s631 = smul.addr %s630, 128
          %s632 = scalar_lea.hbm %s4, %s631
          %s634 = sshll.u32 %s623, 4
          %s635 = int_to_ptr.vmem [resolvable:$true] %s634
          %637 = dma.vmem_to_hbm [thread:$0]  %s635, 256, %s632, %s620
        $region48: #{tpu_custom_call.1} parent=35 // pred_fallthru
          _
      $region36: #{tpu_custom_call.1} parent=5 // pred_fallthru
        _
      %p638 = scmp.le.s32.totalorder 2, %s17
      // Predicated region
      $region49: #{tpu_custom_call.1} parent=5 // pred_check
        %p639 = pneg %p638
      $region50: #{tpu_custom_call.1} parent=5 // pred_check_branch
        %641 = sbr.rel (%p639) target = $region52
      $region51: #{tpu_custom_call.1} parent=5 // pred_region
        %s642 = ssub.s32 %s17, 2
        // Predicated region
        $region53: #{tpu_custom_call.1} parent=51 // pred_check
          %p643 = pneg %p135
        $region54: #{tpu_custom_call.1} parent=51 // pred_check_branch
          %645 = sbr.rel (%p643) target = $region56
        $region55: #{tpu_custom_call.1} parent=51 // pred_region
          %s646 = sand.u32 %s120, 1
          %s647 = scalar_lea.sflag [#allocation6], %s646
          %s648 = sand.u32 %s120, 1
          %s649 = smul.addr %s648, 16
          %s650 = scalar_lea.vmem [#allocation9], %s649
          %651 = dma.done %s647, 256
        $region56: #{tpu_custom_call.1} parent=51 // pred_fallthru
          _
      $region52: #{tpu_custom_call.1} parent=5 // pred_fallthru
        _
    $region6: #{tpu_custom_call.1} parent=1 // loop_footer
      %s21 = sadd.s32 1, %s17
    $region7: #{tpu_custom_call.1} parent=1 // loop_footer_branch
      %16 = sbr.rel target = $region3
    $region8: #{tpu_custom_call.1} parent=1 // loop_exit
      _
    %652 = vsyncpa [#allocation5], 1
    %s653 = scalar_lea.sflag [#allocation5], 1
    %654 = vsyncpa %s653, 1
    %655 = vsyncpa [#allocation8], 1
    %656 = vsyncpa [#allocation6], 1
    %s657 = scalar_lea.sflag [#allocation6], 1
    %658 = vsyncpa %s657, 1

</llo_original>
